<compile_context>
chip_gen: v5e
topology: v5e:2x2
jax: 0.10.0
libtpu: 0.0.40
codegen_flags: <defaults>
</compile_context>

<pallas_src>
import functools

import jax
import jax.numpy as jnp
from jax.experimental import pallas as pl
from jax.experimental.pallas import tpu as pltpu


def _round_up(x, m):
    return ((x + m - 1) // m) * m


def _pointnet_kernel(p_ref,                    # (G*T, P*D_pad)   packed points
                     wpos_ref, bpos_ref,       # (P*D_pad, P*2H), (1, P*2H)
                     w0_ref, b0_ref,           # (P*2H,  P*H),    (1, P*H)
                     wstk_ref, bstk_ref,       # (6, P*H, P*H),   (3, P*H)
                     wc_ref, bc_ref,           # (P*H, P*C),      (1, P*C)
                     out_ref,                  # (G, P*C)
                     *, grp, T):
    GT = p_ref.shape[0]
    PH = w0_ref.shape[1]

    relu = lambda x: jnp.maximum(x, 0.0)

    def dot32(a, w):
        # f32 operands, f32 accumulation on the MXU (no bf16 casts: MXU has
        # huge slack at these widths, the VPU is what binds here).
        return jnp.dot(a, w, preferred_element_type=jnp.float32)

    # ---- fc_pos on the MXU: one (GT, P*D_pad) @ (P*D_pad, P*2H) matmul.
    net = dot32(p_ref[...], wpos_ref[...]) + bpos_ref[...]        # (GT, P*2H)

    # ---- fc_0
    net = dot32(relu(net), w0_ref[...]) + b0_ref[...]             # (GT, P*H)

    # ---- fc_1 / fc_2 / fc_3, concat split into two matmuls.
    def block(net2d, l):
        wt = wstk_ref[2 * l, :, :]                                 # (PH, PH)
        wb = wstk_ref[2 * l + 1, :, :]                             # (PH, PH)
        b = bstk_ref[l:l + 1, :]                                   # (1, PH)
        # Per-sample max over T: sublane-axis reduce (lane groups = samples,
        # so no cross-lane max is needed).
        pooled = jnp.max(net2d.reshape(grp, T, PH), axis=1)        # (G, PH)
        top = dot32(relu(net2d), wt)                               # (GT, PH)
        bot = dot32(relu(pooled), wb) + b                          # (G, PH)
        out3 = top.reshape(grp, T, PH) + bot[:, None, :]
        return out3.reshape(GT, PH)

    net = block(net, 0)
    net = block(net, 1)
    net = block(net, 2)

    # ---- global max-pool over points, then fc_c (lane-dense output).
    pooled = jnp.max(net.reshape(grp, T, PH), axis=1)              # (G, PH)
    c = dot32(relu(pooled), wc_ref[...]) + bc_ref[...]             # (G, P*C)
    out_ref[...] = c.astype(out_ref.dtype)


def simple_pointnet_forward(p, params, *, b_blk=None):
    """p: (B, T, D) float32.  params: dict of (in,out) weights and (1,out) biases."""
    B, T, D = p.shape
    H = params["w0"].shape[1]
    c_dim = params["wc"].shape[1]

    # Samples packed per 128-lane row so H-wide activations fill vregs.
    P = 128 // H if (H <= 128 and 128 % H == 0) else 1
    m = 8 * P                      # b_blk granularity: keeps (b_blk/P) a multiple of 8

    if b_blk is None:
        # Target <= ~8K points per grid step (working set ~<10 MB, fits every
        # TPU gen incl. v7x), pick the step count first, then balance b_blk so
        # padding stays < m samples total (avoids up-to-40% throwaway work).
        cap = max(m, ((8192 // max(T, 1)) // m) * m)
        n_steps = max(1, pl.cdiv(B, cap))
        if n_steps > 1 and n_steps % 2:
            n_steps += 1           # even step count -> both v7x TensorCores busy
        b_blk = _round_up(pl.cdiv(B, n_steps), m)
    else:
        b_blk = _round_up(b_blk, m)
        n_steps = pl.cdiv(B, b_blk)
    B_pad = n_steps * b_blk
    G = b_blk // P                 # packed rows (sample groups) per grid step

    # Pad point dimension to a multiple of 8 so fc_pos is one aligned MXU dot.
    D_pad = _round_up(D, 8)

    # ---- pack input: lane group j of packed row (g, t) holds sample g*P+j.
    pp = jnp.pad(p.astype(jnp.float32),
                 ((0, B_pad - B), (0, 0), (0, D_pad - D)))
    pp = pp.reshape(B_pad // P, P, T, D_pad).transpose(0, 2, 1, 3)
    pp = pp.reshape((B_pad // P) * T, P * D_pad)

    # ---- block-diagonal weights / lane-tiled biases (built once, outside kernel).
    eye_p = jnp.eye(P, dtype=jnp.float32)

    def bd(w):                     # (in, out) -> (P*in, P*out), block-diagonal
        return jnp.kron(eye_p, w.astype(jnp.float32))

    def rep(b):                    # (1, out) -> (1, P*out)
        return jnp.tile(b.astype(jnp.float32), (1, P))

    wpos = bd(jnp.pad(params["wpos"], ((0, D_pad - D), (0, 0))))
    bpos = rep(params["bpos"])
    w0, b0 = bd(params["w0"]), rep(params["b0"])
    # Split concat-layer weights: rows [:H] hit `net`, rows [H:] hit `pooled`.
    wstk = jnp.stack([bd(params["w1"][:H]), bd(params["w1"][H:]),
                      bd(params["w2"][:H]), bd(params["w2"][H:]),
                      bd(params["w3"][:H]), bd(params["w3"][H:])])
    bstk = jnp.concatenate([rep(params["b1"]), rep(params["b2"]),
                            rep(params["b3"])], axis=0)
    wc, bc = bd(params["wc"]), rep(params["bc"])

    def const_spec(x):
        nd = x.ndim
        return pl.BlockSpec(x.shape, lambda b, _nd=nd: (0,) * _nd)

    grid_spec = pltpu.PrefetchScalarGridSpec(
        num_scalar_prefetch=0,
        grid=(n_steps,),
        in_specs=[
            pl.BlockSpec((G * T, P * D_pad), lambda b: (b, 0)),   # point tile
            const_spec(wpos), const_spec(bpos),
            const_spec(w0), const_spec(b0),
            const_spec(wstk), const_spec(bstk),
            const_spec(wc), const_spec(bc),
        ],
        out_specs=pl.BlockSpec((G, P * c_dim), lambda b: (b, 0)),
    )

    out = pl.pallas_call(
        functools.partial(_pointnet_kernel, grp=G, T=T),
        out_shape=jax.ShapeDtypeStruct((B_pad // P, P * c_dim), jnp.float32),
        grid_spec=grid_spec,
        compiler_params=pltpu.CompilerParams(
            dimension_semantics=("parallel",),      # shard batch tiles across TCs
            vmem_limit_bytes=48 * 1024 * 1024,      # < 64 MiB (v7x), ample on v5e/v6e
        ),
    )(pp, wpos, bpos, w0, b0, wstk, bstk, wc, bc)

    # Unpack lane groups back into the batch dimension and drop padding.
    out = out.reshape(B_pad // P, P, c_dim).reshape(B_pad, c_dim)
    return out[:B]


def init_params(key, dim=3, hidden_dim=32, c_dim=32):
    """Deterministic synthetic init.  Weights stored as (in, out); biases as (1, out)."""
    def linear_init(k, fan_in, fan_out):
        kw, kb = jax.random.split(k)
        bound = 1.0 / jnp.sqrt(fan_in)
        w = jax.random.uniform(kw, (fan_in, fan_out), jnp.float32, -bound, bound)
        b = jax.random.uniform(kb, (1, fan_out), jnp.float32, -bound, bound)
        return w, b

    keys = jax.random.split(key, 6)
    params = {}
    params["wpos"], params["bpos"] = linear_init(keys[0], dim, 2 * hidden_dim)
    params["w0"], params["b0"] = linear_init(keys[1], 2 * hidden_dim, hidden_dim)
    params["w1"], params["b1"] = linear_init(keys[2], 2 * hidden_dim, hidden_dim)
    params["w2"], params["b2"] = linear_init(keys[3], 2 * hidden_dim, hidden_dim)
    params["w3"], params["b3"] = linear_init(keys[4], 2 * hidden_dim, hidden_dim)
    params["wc"], params["bc"] = linear_init(keys[5], hidden_dim, c_dim)
    return params


def reference_forward(p, params):
    """Pure-JAX reference mirroring the PyTorch forward (concat version)."""
    relu = lambda x: jnp.maximum(x, 0.0)
    lin = lambda x, w, b: jnp.dot(x, w, precision=jax.lax.Precision.HIGHEST) + b
    net = lin(p, params["wpos"], params["bpos"])
    net = lin(relu(net), params["w0"], params["b0"])
    for name in ("1", "2", "3"):
        pooled = jnp.max(net, axis=1, keepdims=True)
        net = jnp.concatenate([net, jnp.broadcast_to(pooled, net.shape)], axis=2)
        net = lin(relu(net), params["w" + name], params["b" + name])
    net = jnp.max(net, axis=1)
    return lin(relu(net), params["wc"], params["bc"])


if __name__ == "__main__":
    T, D = 8, 3
    hidden_dim, c_dim = 32, 32

    key = jax.random.PRNGKey(0)
    kp, kw = jax.random.split(key)
    params = init_params(kw, dim=D, hidden_dim=hidden_dim, c_dim=c_dim)

    # Small case from the spec: batch=2 (single step, adaptive b_blk).
    B = 2
    p = jax.random.normal(kp, (B, T, D), dtype=jnp.float32)
    out = jax.block_until_ready(simple_pointnet_forward(p, params))
    ref = reference_forward(p, params)
    assert out.shape == (B, c_dim)
    assert jnp.allclose(out, ref, atol=1e-3, rtol=1e-3), "mismatch vs JAX reference"

    # Larger, non-divisible batch -> exercises sample packing, padding, and a
    # multi-step "parallel" grid (200 samples, explicit 64-sample tiles).
    B2 = 200
    p2 = jax.random.normal(jax.random.PRNGKey(1), (B2, T, D), dtype=jnp.float32)
    out2 = jax.block_until_ready(simple_pointnet_forward(p2, params, b_blk=64))
    ref2 = reference_forward(p2, params)
    assert out2.shape == (B2, c_dim)
    assert jnp.allclose(out2, ref2, atol=1e-3, rtol=1e-3), "mismatch (padded batch)"

    # Adaptive-tiling path on the same batch.
    out3 = jax.block_until_ready(simple_pointnet_forward(p2, params))
    assert jnp.allclose(out3, ref2, atol=1e-3, rtol=1e-3), "mismatch (adaptive tiling)"

    print("KERNEL_OK")
</pallas_src>

<mosaic_0001>
module attributes {stable_mosaic.version = 11 : i64} {
  func.func @_pointnet_kernel(%arg0: i32, %arg1: memref<64x32xf32, #tpu.memory_space<vmem>>, %arg2: memref<32x256xf32, #tpu.memory_space<vmem>>, %arg3: memref<1x256xf32, #tpu.memory_space<vmem>>, %arg4: memref<256x128xf32, #tpu.memory_space<vmem>>, %arg5: memref<1x128xf32, #tpu.memory_space<vmem>>, %arg6: memref<6x128x128xf32, #tpu.memory_space<vmem>>, %arg7: memref<3x128xf32, #tpu.memory_space<vmem>>, %arg8: memref<128x128xf32, #tpu.memory_space<vmem>>, %arg9: memref<1x128xf32, #tpu.memory_space<vmem>>, %arg10: memref<8x128xf32, #tpu.memory_space<vmem>>) attributes {dimension_semantics = [#tpu.dimension_semantics<parallel>], iteration_bounds = array<i64: 1>, scalar_prefetch = 0 : i64, scratch_operands = 0 : i64, tpu.core_type = #tpu.core_type<tc>, window_params = [{transform_indices = @transform_0, window_bounds = array<i64: 64, 32>}, {pipeline_mode = #tpu.pipeline_mode<synchronous>, transform_indices = @transform_1, window_bounds = array<i64: 32, 256>}, {pipeline_mode = #tpu.pipeline_mode<synchronous>, transform_indices = @transform_2, window_bounds = array<i64: 1, 256>}, {pipeline_mode = #tpu.pipeline_mode<synchronous>, transform_indices = @transform_3, window_bounds = array<i64: 256, 128>}, {pipeline_mode = #tpu.pipeline_mode<synchronous>, transform_indices = @transform_4, window_bounds = array<i64: 1, 128>}, {pipeline_mode = #tpu.pipeline_mode<synchronous>, transform_indices = @transform_5, window_bounds = array<i64: 6, 128, 128>}, {pipeline_mode = #tpu.pipeline_mode<synchronous>, transform_indices = @transform_6, window_bounds = array<i64: 3, 128>}, {pipeline_mode = #tpu.pipeline_mode<synchronous>, transform_indices = @transform_7, window_bounds = array<i64: 128, 128>}, {pipeline_mode = #tpu.pipeline_mode<synchronous>, transform_indices = @transform_8, window_bounds = array<i64: 1, 128>}, {transform_indices = @transform_9, window_bounds = array<i64: 8, 128>}]} {
    %c0 = arith.constant 0 : index
    %c0_0 = arith.constant 0 : index
    %0 = vector.load %arg1[%c0, %c0_0] : memref<64x32xf32, #tpu.memory_space<vmem>>, vector<64x32xf32>
    %c0_1 = arith.constant 0 : index
    %c0_2 = arith.constant 0 : index
    %1 = vector.load %arg2[%c0_1, %c0_2] : memref<32x256xf32, #tpu.memory_space<vmem>>, vector<32x256xf32>
    %cst = arith.constant dense<0.000000e+00> : vector<64x256xf32>
    %2 = tpu.matmul %0, %1, %cst {dimension_numbers = #tpu.dot_dimension_numbers<[1], [0], [0], [1], [0, 0, 1, 1], [], []>} : vector<64x32xf32>, vector<32x256xf32>, vector<64x256xf32> -> vector<64x256xf32>
    %c0_3 = arith.constant 0 : index
    %c0_4 = arith.constant 0 : index
    %3 = vector.load %arg3[%c0_3, %c0_4] : memref<1x256xf32, #tpu.memory_space<vmem>>, vector<1x256xf32>
    %4 = vector.broadcast %3 : vector<1x256xf32> to vector<64x256xf32>
    %5 = arith.addf %2, %4 : vector<64x256xf32>
    %cst_5 = arith.constant 0.000000e+00 : f32
    %6 = vector.broadcast %cst_5 : f32 to vector<64x256xf32>
    %7 = arith.maximumf %5, %6 : vector<64x256xf32>
    %c0_6 = arith.constant 0 : index
    %c0_7 = arith.constant 0 : index
    %8 = vector.load %arg4[%c0_6, %c0_7] : memref<256x128xf32, #tpu.memory_space<vmem>>, vector<256x128xf32>
    %cst_8 = arith.constant dense<0.000000e+00> : vector<64x128xf32>
    %9 = tpu.matmul %7, %8, %cst_8 {dimension_numbers = #tpu.dot_dimension_numbers<[1], [0], [0], [1], [0, 0, 1, 1], [], []>} : vector<64x256xf32>, vector<256x128xf32>, vector<64x128xf32> -> vector<64x128xf32>
    %c0_9 = arith.constant 0 : index
    %c0_10 = arith.constant 0 : index
    %10 = vector.load %arg5[%c0_9, %c0_10] : memref<1x128xf32, #tpu.memory_space<vmem>>, vector<1x128xf32>
    %11 = vector.broadcast %10 : vector<1x128xf32> to vector<64x128xf32>
    %12 = arith.addf %9, %11 : vector<64x128xf32>
    %c0_11 = arith.constant 0 : index
    %c0_12 = arith.constant 0 : index
    %c0_13 = arith.constant 0 : index
    %13 = vector.load %arg6[%c0_11, %c0_12, %c0_13] : memref<6x128x128xf32, #tpu.memory_space<vmem>>, vector<1x128x128xf32>
    %14 = vector.shape_cast %13 : vector<1x128x128xf32> to vector<128x128xf32>
    %c1 = arith.constant 1 : index
    %c0_14 = arith.constant 0 : index
    %c0_15 = arith.constant 0 : index
    %15 = vector.load %arg6[%c1, %c0_14, %c0_15] : memref<6x128x128xf32, #tpu.memory_space<vmem>>, vector<1x128x128xf32>
    %16 = vector.shape_cast %15 : vector<1x128x128xf32> to vector<128x128xf32>
    %c0_16 = arith.constant 0 : index
    %c0_17 = arith.constant 0 : index
    %17 = vector.load %arg7[%c0_16, %c0_17] : memref<3x128xf32, #tpu.memory_space<vmem>>, vector<1x128xf32>
    %18 = vector.shape_cast %12 : vector<64x128xf32> to vector<8x8x128xf32>
    %cst_18 = arith.constant dense<0xFF800000> : vector<8x128xf32>
    %19 = vector.multi_reduction <maximumf>, %18, %cst_18 [1] : vector<8x8x128xf32> to vector<8x128xf32>
    %cst_19 = arith.constant 0.000000e+00 : f32
    %20 = vector.broadcast %cst_19 : f32 to vector<64x128xf32>
    %21 = arith.maximumf %12, %20 : vector<64x128xf32>
    %cst_20 = arith.constant dense<0.000000e+00> : vector<64x128xf32>
    %22 = tpu.matmul %21, %14, %cst_20 {dimension_numbers = #tpu.dot_dimension_numbers<[1], [0], [0], [1], [0, 0, 1, 1], [], []>} : vector<64x128xf32>, vector<128x128xf32>, vector<64x128xf32> -> vector<64x128xf32>
    %cst_21 = arith.constant 0.000000e+00 : f32
    %23 = vector.broadcast %cst_21 : f32 to vector<8x128xf32>
    %24 = arith.maximumf %19, %23 : vector<8x128xf32>
    %cst_22 = arith.constant dense<0.000000e+00> : vector<8x128xf32>
    %25 = tpu.matmul %24, %16, %cst_22 {dimension_numbers = #tpu.dot_dimension_numbers<[1], [0], [0], [1], [0, 0, 1, 1], [], []>} : vector<8x128xf32>, vector<128x128xf32>, vector<8x128xf32> -> vector<8x128xf32>
    %26 = vector.broadcast %17 : vector<1x128xf32> to vector<8x128xf32>
    %27 = arith.addf %25, %26 : vector<8x128xf32>
    %28 = vector.shape_cast %22 : vector<64x128xf32> to vector<8x8x128xf32>
    %29 = vector.shape_cast %27 : vector<8x128xf32> to vector<8x1x128xf32>
    %30 = vector.broadcast %29 : vector<8x1x128xf32> to vector<8x8x128xf32>
    %31 = arith.addf %28, %30 : vector<8x8x128xf32>
    %32 = vector.shape_cast %31 : vector<8x8x128xf32> to vector<64x128xf32>
    %c2 = arith.constant 2 : index
    %c0_23 = arith.constant 0 : index
    %c0_24 = arith.constant 0 : index
    %33 = vector.load %arg6[%c2, %c0_23, %c0_24] : memref<6x128x128xf32, #tpu.memory_space<vmem>>, vector<1x128x128xf32>
    %34 = vector.shape_cast %33 : vector<1x128x128xf32> to vector<128x128xf32>
    %c3 = arith.constant 3 : index
    %c0_25 = arith.constant 0 : index
    %c0_26 = arith.constant 0 : index
    %35 = vector.load %arg6[%c3, %c0_25, %c0_26] : memref<6x128x128xf32, #tpu.memory_space<vmem>>, vector<1x128x128xf32>
    %36 = vector.shape_cast %35 : vector<1x128x128xf32> to vector<128x128xf32>
    %c1_27 = arith.constant 1 : index
    %c0_28 = arith.constant 0 : index
    %37 = vector.load %arg7[%c1_27, %c0_28] : memref<3x128xf32, #tpu.memory_space<vmem>>, vector<1x128xf32>
    %38 = vector.shape_cast %32 : vector<64x128xf32> to vector<8x8x128xf32>
    %cst_29 = arith.constant dense<0xFF800000> : vector<8x128xf32>
    %39 = vector.multi_reduction <maximumf>, %38, %cst_29 [1] : vector<8x8x128xf32> to vector<8x128xf32>
    %cst_30 = arith.constant 0.000000e+00 : f32
    %40 = vector.broadcast %cst_30 : f32 to vector<64x128xf32>
    %41 = arith.maximumf %32, %40 : vector<64x128xf32>
    %cst_31 = arith.constant dense<0.000000e+00> : vector<64x128xf32>
    %42 = tpu.matmul %41, %34, %cst_31 {dimension_numbers = #tpu.dot_dimension_numbers<[1], [0], [0], [1], [0, 0, 1, 1], [], []>} : vector<64x128xf32>, vector<128x128xf32>, vector<64x128xf32> -> vector<64x128xf32>
    %cst_32 = arith.constant 0.000000e+00 : f32
    %43 = vector.broadcast %cst_32 : f32 to vector<8x128xf32>
    %44 = arith.maximumf %39, %43 : vector<8x128xf32>
    %cst_33 = arith.constant dense<0.000000e+00> : vector<8x128xf32>
    %45 = tpu.matmul %44, %36, %cst_33 {dimension_numbers = #tpu.dot_dimension_numbers<[1], [0], [0], [1], [0, 0, 1, 1], [], []>} : vector<8x128xf32>, vector<128x128xf32>, vector<8x128xf32> -> vector<8x128xf32>
    %46 = vector.broadcast %37 : vector<1x128xf32> to vector<8x128xf32>
    %47 = arith.addf %45, %46 : vector<8x128xf32>
    %48 = vector.shape_cast %42 : vector<64x128xf32> to vector<8x8x128xf32>
    %49 = vector.shape_cast %47 : vector<8x128xf32> to vector<8x1x128xf32>
    %50 = vector.broadcast %49 : vector<8x1x128xf32> to vector<8x8x128xf32>
    %51 = arith.addf %48, %50 : vector<8x8x128xf32>
    %52 = vector.shape_cast %51 : vector<8x8x128xf32> to vector<64x128xf32>
    %c4 = arith.constant 4 : index
    %c0_34 = arith.constant 0 : index
    %c0_35 = arith.constant 0 : index
    %53 = vector.load %arg6[%c4, %c0_34, %c0_35] : memref<6x128x128xf32, #tpu.memory_space<vmem>>, vector<1x128x128xf32>
    %54 = vector.shape_cast %53 : vector<1x128x128xf32> to vector<128x128xf32>
    %c5 = arith.constant 5 : index
    %c0_36 = arith.constant 0 : index
    %c0_37 = arith.constant 0 : index
    %55 = vector.load %arg6[%c5, %c0_36, %c0_37] : memref<6x128x128xf32, #tpu.memory_space<vmem>>, vector<1x128x128xf32>
    %56 = vector.shape_cast %55 : vector<1x128x128xf32> to vector<128x128xf32>
    %c2_38 = arith.constant 2 : index
    %c0_39 = arith.constant 0 : index
    %57 = vector.load %arg7[%c2_38, %c0_39] : memref<3x128xf32, #tpu.memory_space<vmem>>, vector<1x128xf32>
    %58 = vector.shape_cast %52 : vector<64x128xf32> to vector<8x8x128xf32>
    %cst_40 = arith.constant dense<0xFF800000> : vector<8x128xf32>
    %59 = vector.multi_reduction <maximumf>, %58, %cst_40 [1] : vector<8x8x128xf32> to vector<8x128xf32>
    %cst_41 = arith.constant 0.000000e+00 : f32
    %60 = vector.broadcast %cst_41 : f32 to vector<64x128xf32>
    %61 = arith.maximumf %52, %60 : vector<64x128xf32>
    %cst_42 = arith.constant dense<0.000000e+00> : vector<64x128xf32>
    %62 = tpu.matmul %61, %54, %cst_42 {dimension_numbers = #tpu.dot_dimension_numbers<[1], [0], [0], [1], [0, 0, 1, 1], [], []>} : vector<64x128xf32>, vector<128x128xf32>, vector<64x128xf32> -> vector<64x128xf32>
    %cst_43 = arith.constant 0.000000e+00 : f32
    %63 = vector.broadcast %cst_43 : f32 to vector<8x128xf32>
    %64 = arith.maximumf %59, %63 : vector<8x128xf32>
    %cst_44 = arith.constant dense<0.000000e+00> : vector<8x128xf32>
    %65 = tpu.matmul %64, %56, %cst_44 {dimension_numbers = #tpu.dot_dimension_numbers<[1], [0], [0], [1], [0, 0, 1, 1], [], []>} : vector<8x128xf32>, vector<128x128xf32>, vector<8x128xf32> -> vector<8x128xf32>
    %66 = vector.broadcast %57 : vector<1x128xf32> to vector<8x128xf32>
    %67 = arith.addf %65, %66 : vector<8x128xf32>
    %68 = vector.shape_cast %62 : vector<64x128xf32> to vector<8x8x128xf32>
    %69 = vector.shape_cast %67 : vector<8x128xf32> to vector<8x1x128xf32>
    %70 = vector.broadcast %69 : vector<8x1x128xf32> to vector<8x8x128xf32>
    %71 = arith.addf %68, %70 : vector<8x8x128xf32>
    %72 = vector.shape_cast %71 : vector<8x8x128xf32> to vector<64x128xf32>
    %73 = vector.shape_cast %72 : vector<64x128xf32> to vector<8x8x128xf32>
    %cst_45 = arith.constant dense<0xFF800000> : vector<8x128xf32>
    %74 = vector.multi_reduction <maximumf>, %73, %cst_45 [1] : vector<8x8x128xf32> to vector<8x128xf32>
    %cst_46 = arith.constant 0.000000e+00 : f32
    %75 = vector.broadcast %cst_46 : f32 to vector<8x128xf32>
    %76 = arith.maximumf %74, %75 : vector<8x128xf32>
    %c0_47 = arith.constant 0 : index
    %c0_48 = arith.constant 0 : index
    %77 = vector.load %arg8[%c0_47, %c0_48] : memref<128x128xf32, #tpu.memory_space<vmem>>, vector<128x128xf32>
    %cst_49 = arith.constant dense<0.000000e+00> : vector<8x128xf32>
    %78 = tpu.matmul %76, %77, %cst_49 {dimension_numbers = #tpu.dot_dimension_numbers<[1], [0], [0], [1], [0, 0, 1, 1], [], []>} : vector<8x128xf32>, vector<128x128xf32>, vector<8x128xf32> -> vector<8x128xf32>
    %c0_50 = arith.constant 0 : index
    %c0_51 = arith.constant 0 : index
    %79 = vector.load %arg9[%c0_50, %c0_51] : memref<1x128xf32, #tpu.memory_space<vmem>>, vector<1x128xf32>
    %80 = vector.broadcast %79 : vector<1x128xf32> to vector<8x128xf32>
    %81 = arith.addf %78, %80 : vector<8x128xf32>
    %c0_52 = arith.constant 0 : index
    %c0_53 = arith.constant 0 : index
    %82 = vector.load %arg10[%c0_52, %c0_53] : memref<8x128xf32, #tpu.memory_space<vmem>>, vector<8x128xf32>
    tpu.vector_store %arg10[%c0_52, %c0_53], %81 {strides = array<i32>} : memref<8x128xf32, #tpu.memory_space<vmem>>, vector<8x128xf32>,
    return
  }
  func.func @transform_0(%arg0: i32) -> (i32, i32) {
    %c0_i32 = arith.constant 0 : i32
    %c0_i32_0 = arith.constant 0 : i32
    return %arg0, %c0_i32 : i32, i32
  }
  func.func @transform_1(%arg0: i32) -> (i32, i32) {
    %c0_i32 = arith.constant 0 : i32
    %c0_i32_0 = arith.constant 0 : i32
    %c0_i32_1 = arith.constant 0 : i32
    return %c0_i32, %c0_i32_0 : i32, i32
  }
  func.func @transform_2(%arg0: i32) -> (i32, i32) {
    %c0_i32 = arith.constant 0 : i32
    %c0_i32_0 = arith.constant 0 : i32
    %c0_i32_1 = arith.constant 0 : i32
    return %c0_i32, %c0_i32_0 : i32, i32
  }
  func.func @transform_3(%arg0: i32) -> (i32, i32) {
    %c0_i32 = arith.constant 0 : i32
    %c0_i32_0 = arith.constant 0 : i32
    %c0_i32_1 = arith.constant 0 : i32
    return %c0_i32, %c0_i32_0 : i32, i32
  }
  func.func @transform_4(%arg0: i32) -> (i32, i32) {
    %c0_i32 = arith.constant 0 : i32
    %c0_i32_0 = arith.constant 0 : i32
    %c0_i32_1 = arith.constant 0 : i32
    return %c0_i32, %c0_i32_0 : i32, i32
  }
  func.func @transform_5(%arg0: i32) -> (i32, i32, i32) {
    %c0_i32 = arith.constant 0 : i32
    %c0_i32_0 = arith.constant 0 : i32
    %c0_i32_1 = arith.constant 0 : i32
    %c0_i32_2 = arith.constant 0 : i32
    return %c0_i32, %c0_i32_0, %c0_i32_1 : i32, i32, i32
  }
  func.func @transform_6(%arg0: i32) -> (i32, i32) {
    %c0_i32 = arith.constant 0 : i32
    %c0_i32_0 = arith.constant 0 : i32
    %c0_i32_1 = arith.constant 0 : i32
    return %c0_i32, %c0_i32_0 : i32, i32
  }
  func.func @transform_7(%arg0: i32) -> (i32, i32) {
    %c0_i32 = arith.constant 0 : i32
    %c0_i32_0 = arith.constant 0 : i32
    %c0_i32_1 = arith.constant 0 : i32
    return %c0_i32, %c0_i32_0 : i32, i32
  }
  func.func @transform_8(%arg0: i32) -> (i32, i32) {
    %c0_i32 = arith.constant 0 : i32
    %c0_i32_0 = arith.constant 0 : i32
    %c0_i32_1 = arith.constant 0 : i32
    return %c0_i32, %c0_i32_0 : i32, i32
  }
  func.func @transform_9(%arg0: i32) -> (i32, i32) {
    %c0_i32 = arith.constant 0 : i32
    %c0_i32_0 = arith.constant 0 : i32
    return %arg0, %c0_i32 : i32, i32
  }
}

</mosaic_0001>

<llo_original>
// kernel: tpu_custom_call.1
$region0: #{tpu_custom_call.1}
  #allocation0 [shape = 'u32[]', space=smem, size = 0x4, offset = 0x4, fixed_abs, tag = 'smem constant byte address 0x4 - core index']
  #allocation1 [shape = 'u32[72,128]{1,0:T(1,128)}', space=vmem, size = 0x9000, scoped, tag = 'internal scratch']
  %s0 = inlined_call_operand.vmem [shape: f32[64,32], index: 0, kind: input, shape index: {}]
  %s1 = inlined_call_operand.vmem [shape: f32[32,256], index: 1, kind: input, shape index: {}]
  %s2 = inlined_call_operand.vmem [shape: f32[1,256], index: 2, kind: input, shape index: {}]
  %s3 = inlined_call_operand.hbm [shape: f32[256,128], index: 3, kind: input, shape index: {}]
  %s4 = inlined_call_operand.vmem [shape: f32[1,128], index: 4, kind: input, shape index: {}]
  %s5 = inlined_call_operand.hbm [shape: f32[6,128,128], index: 5, kind: input, shape index: {}]
  %s6 = inlined_call_operand.vmem [shape: f32[3,128], index: 6, kind: input, shape index: {}]
  %s7 = inlined_call_operand.hbm [shape: f32[128,128], index: 7, kind: input, shape index: {}]
  %s8 = inlined_call_operand.vmem [shape: f32[1,128], index: 8, kind: input, shape index: {}]
  %s9 = inlined_call_operand.hbm [shape: f32[8,128], index: 9, kind: output, shape index: {}]
  %s10 = sld [smem:[#allocation0]]
  $region58: #{tpu_custom_call.1} parent=0
    _
  %s12 = ssub.s32 1, %s10
  %s13 = scalar_select 0, %s12, %s10
  $region1: #{tpu_custom_call.1} parent=0
    #allocation2 [shape = 'u8[131072]{0}', space=vmem, size = 0x20000, scoped, tag = 'input window, operand 3, single buffered']
    #allocation3 [shape = 's32[1]{0}', space=sflag, size = 0x4, scoped, tag = 'scoped memory for tpu_custom_call.1']
    #allocation4 [shape = 's32[1]{0}', space=sflag, size = 0x4, scoped, tag = 'scoped memory for tpu_custom_call.1']
    #allocation5 [shape = 'u8[393216]{0}', space=vmem, size = 0x60000, scoped, tag = 'input window, operand 5, single buffered']
    #allocation6 [shape = 's32[1]{0}', space=sflag, size = 0x4, scoped, tag = 'scoped memory for tpu_custom_call.1']
    #allocation7 [shape = 'u8[65536]{0}', space=vmem, size = 0x10000, scoped, tag = 'input window, operand 7, single buffered']
    #allocation8 [shape = 'u8[4096]{0}', space=vmem, size = 0x1000, scoped, tag = 'output window, operand 0, single buffered']
    %14 = vsyncpa [#allocation3], 0
    %15 = vsyncpa [#allocation6], 0
    %16 = vsyncpa [#allocation4], 0
    // Predicated region
    $region2: #{tpu_custom_call.1} parent=1 // pred_check
      _
    $region3: #{tpu_custom_call.1} parent=1 // pred_check_branch
      %18 = sbr.rel (0) target = $region5
    $region4: #{tpu_custom_call.1} parent=1 // pred_region
      _
    $region5: #{tpu_custom_call.1} parent=1 // pred_fallthru
      _
    // Predicated region
    $region6: #{tpu_custom_call.1} parent=1 // pred_check
      _
    $region7: #{tpu_custom_call.1} parent=1 // pred_check_branch
      %20 = sbr.rel (0) target = $region9
    $region8: #{tpu_custom_call.1} parent=1 // pred_region
      _
    $region9: #{tpu_custom_call.1} parent=1 // pred_fallthru
      _
    // Predicated region
    $region10: #{tpu_custom_call.1} parent=1 // pred_check
      _
    $region11: #{tpu_custom_call.1} parent=1 // pred_check_branch
      %22 = sbr.rel (0) target = $region13
    $region12: #{tpu_custom_call.1} parent=1 // pred_region
      _
    $region13: #{tpu_custom_call.1} parent=1 // pred_fallthru
      _
    // Predicated region
    $region14: #{tpu_custom_call.1} parent=1 // pred_check
      _
    $region15: #{tpu_custom_call.1} parent=1 // pred_check_branch
      %24 = sbr.rel (0) target = $region17
    $region16: #{tpu_custom_call.1} parent=1 // pred_region
      %26 = vsyncadd [#allocation3], 0
      %s27 = sshll.u32 %s3, 4
      %s28 = int_to_ptr.hbm [resolvable:$true] %s27
      %s29 = sshll.u32 [#allocation2], 4
      %s30 = int_to_ptr.vmem [resolvable:$true] %s29
      %35 = dma.hbm_to_vmem [thread:$0]  %s28, 4096, %s30, [#allocation3], 128, 128, 8
    $region17: #{tpu_custom_call.1} parent=1 // pred_fallthru
      _
    // Predicated region
    $region18: #{tpu_custom_call.1} parent=1 // pred_check
      _
    $region19: #{tpu_custom_call.1} parent=1 // pred_check_branch
      %37 = sbr.rel (0) target = $region21
    $region20: #{tpu_custom_call.1} parent=1 // pred_region
      _
    $region21: #{tpu_custom_call.1} parent=1 // pred_fallthru
      _
    // Predicated region
    $region22: #{tpu_custom_call.1} parent=1 // pred_check
      _
    $region23: #{tpu_custom_call.1} parent=1 // pred_check_branch
      %39 = sbr.rel (0) target = $region25
    $region24: #{tpu_custom_call.1} parent=1 // pred_region
      %41 = vsyncadd [#allocation6], 0
      %s42 = sshll.u32 %s5, 4
      %s43 = int_to_ptr.hbm [resolvable:$true] %s42
      %s44 = sshll.u32 [#allocation5], 4
      %s45 = int_to_ptr.vmem [resolvable:$true] %s44
      %50 = dma.hbm_to_vmem [thread:$0]  %s43, 12288, %s45, [#allocation6], 128, 128, 8
    $region25: #{tpu_custom_call.1} parent=1 // pred_fallthru
      _
    // Predicated region
    $region26: #{tpu_custom_call.1} parent=1 // pred_check
      _
    $region27: #{tpu_custom_call.1} parent=1 // pred_check_branch
      %52 = sbr.rel (0) target = $region29
    $region28: #{tpu_custom_call.1} parent=1 // pred_region
      _
    $region29: #{tpu_custom_call.1} parent=1 // pred_fallthru
      _
    // Predicated region
    $region30: #{tpu_custom_call.1} parent=1 // pred_check
      _
    $region31: #{tpu_custom_call.1} parent=1 // pred_check_branch
      %54 = sbr.rel (0) target = $region33
    $region32: #{tpu_custom_call.1} parent=1 // pred_region
      %56 = vsyncadd [#allocation6], 0
      %s57 = sshll.u32 %s7, 4
      %s58 = int_to_ptr.hbm [resolvable:$true] %s57
      %s59 = sshll.u32 [#allocation7], 4
      %s60 = int_to_ptr.vmem [resolvable:$true] %s59
      %65 = dma.hbm_to_vmem [thread:$0]  %s58, 2048, %s60, [#allocation6], 128, 128, 8
    $region33: #{tpu_custom_call.1} parent=1 // pred_fallthru
      _
    // Predicated region
    $region34: #{tpu_custom_call.1} parent=1 // pred_check
      _
    $region35: #{tpu_custom_call.1} parent=1 // pred_check_branch
      %67 = sbr.rel (0) target = $region37
    $region36: #{tpu_custom_call.1} parent=1 // pred_region
      _
    $region37: #{tpu_custom_call.1} parent=1 // pred_fallthru
      _
    // Predicated region
    $region38: #{tpu_custom_call.1} parent=1 // pred_check
      _
    $region39: #{tpu_custom_call.1} parent=1 // pred_check_branch
      %69 = sbr.rel (0) target = $region41
    $region40: #{tpu_custom_call.1} parent=1 // pred_region
      %71 = dma.done [#allocation3], 4096
    $region41: #{tpu_custom_call.1} parent=1 // pred_fallthru
      _
    // Predicated region
    $region42: #{tpu_custom_call.1} parent=1 // pred_check
      _
    $region43: #{tpu_custom_call.1} parent=1 // pred_check_branch
      %73 = sbr.rel (0) target = $region45
    $region44: #{tpu_custom_call.1} parent=1 // pred_region
      %75 = dma.done [#allocation6], 12288
    $region45: #{tpu_custom_call.1} parent=1 // pred_fallthru
      _
    // Predicated region
    $region46: #{tpu_custom_call.1} parent=1 // pred_check
      _
    $region47: #{tpu_custom_call.1} parent=1 // pred_check_branch
      %77 = sbr.rel (0) target = $region49
    $region48: #{tpu_custom_call.1} parent=1 // pred_region
      %79 = dma.done [#allocation6], 2048
    $region49: #{tpu_custom_call.1} parent=1 // pred_fallthru
      _
    %v80 = vld [vmem:[%s0] sm:$0xff]
    %v81 = vld [vmem:[%s0 + $0x8] sm:$0xff]
    %v82 = vld [vmem:[%s0 + $0x10] sm:$0xff]
    %v83 = vld [vmem:[%s0 + $0x18] sm:$0xff]
    %v84 = vld [vmem:[%s0 + $0x20] sm:$0xff]
    %v85 = vld [vmem:[%s0 + $0x28] sm:$0xff]
    %v86 = vld [vmem:[%s0 + $0x30] sm:$0xff]
    %v87 = vld [vmem:[%s0 + $0x38] sm:$0xff]
    %v88 = vld [vmem:[%s1] sm:$0xff]
    %v89 = vld [vmem:[%s1 + $0x8] sm:$0xff]
    %v90 = vld [vmem:[%s1 + $0x10] sm:$0xff]
    %v91 = vld [vmem:[%s1 + $0x18] sm:$0xff]
    %v92 = vld [vmem:[%s1 + $0x20] sm:$0xff]
    %v93 = vld [vmem:[%s1 + $0x28] sm:$0xff]
    %v94 = vld [vmem:[%s1 + $0x30] sm:$0xff]
    %v95 = vld [vmem:[%s1 + $0x38] sm:$0xff]
    %v96 = vld [vmem:[%s2] sm:$0x3]
    %v98 = vperm.slane %v96, 0
    %v99 = vperm.slane %v96, 1
    %vm102 = vcmask 261120
    %v104 = vsel %vm102, %v80, 0
    %v107 = vsel %vm102, %v81, 0
    %v110 = vsel %vm102, %v82, 0
    %v113 = vsel %vm102, %v83, 0
    %v116 = vsel %vm102, %v84, 0
    %v119 = vsel %vm102, %v85, 0
    %v122 = vsel %vm102, %v86, 0
    %v125 = vsel %vm102, %v87, 0
    %127 = vmatpush.msra.mxu0 0.0
    %128 = vmatpush.msra.mxu0 0.0
    %129 = vmatpush.msra.mxu0 0.0
    %130 = vmatpush.msra.mxu0 0.0
    %131 = vmatpush.msra.mxu0 0.0
    %132 = vmatpush.msra.mxu0 0.0
    %133 = vmatpush.msra.mxu0 0.0
    %134 = vmatpush.msra.mxu0 0.0
    %135 = vmatpush.msra.mxu0 0.0
    %136 = vmatpush.msra.mxu0 0.0
    %137 = vmatpush.msra.mxu0 0.0
    %138 = vmatpush.msra.mxu0 0.0
    %139 = vmatpush.msra.mxu0 %v94
    %140 = vmatpush.msra.mxu0 %v92
    %141 = vmatpush.msra.mxu0 %v90
    %142 = vmatpush.msra.mxu0 %v88
    %143 = vmatmul.f32.gmra.mxu0 %v104
    %v144 = vpop.f32.mrf.mxu0
    %v145 = vadd.f32 %v98, %v144
    %146 = vmatmul.f32.gmra.mxu0 %v107
    %v147 = vpop.f32.mrf.mxu0
    %v148 = vadd.f32 %v98, %v147
    %149 = vmatmul.f32.gmra.mxu0 %v110
    %v150 = vpop.f32.mrf.mxu0
    %v151 = vadd.f32 %v98, %v150
    %152 = vmatmul.f32.gmra.mxu0 %v113
    %v153 = vpop.f32.mrf.mxu0
    %v154 = vadd.f32 %v98, %v153
    %155 = vmatmul.f32.gmra.mxu0 %v116
    %v156 = vpop.f32.mrf.mxu0
    %v157 = vadd.f32 %v98, %v156
    %158 = vmatmul.f32.gmra.mxu0 %v119
    %v159 = vpop.f32.mrf.mxu0
    %v160 = vadd.f32 %v98, %v159
    %161 = vmatmul.f32.gmra.mxu0 %v122
    %v162 = vpop.f32.mrf.mxu0
    %v163 = vadd.f32 %v98, %v162
    %164 = vmatmul.f32.gmra.mxu0 %v125
    %v165 = vpop.f32.mrf.mxu0
    %v166 = vadd.f32 %v98, %v165
    %167 = vdwg.mxu0
    %168 = vmatpush.msra.mxu0 0.0
    %169 = vmatpush.msra.mxu0 0.0
    %170 = vmatpush.msra.mxu0 0.0
    %171 = vmatpush.msra.mxu0 0.0
    %172 = vmatpush.msra.mxu0 0.0
    %173 = vmatpush.msra.mxu0 0.0
    %174 = vmatpush.msra.mxu0 0.0
    %175 = vmatpush.msra.mxu0 0.0
    %176 = vmatpush.msra.mxu0 0.0
    %177 = vmatpush.msra.mxu0 0.0
    %178 = vmatpush.msra.mxu0 0.0
    %179 = vmatpush.msra.mxu0 0.0
    %180 = vmatpush.msra.mxu0 %v95
    %181 = vmatpush.msra.mxu0 %v93
    %182 = vmatpush.msra.mxu0 %v91
    %183 = vmatpush.msra.mxu0 %v89
    %184 = vmatmul.f32.gmra.mxu0 %v104
    %v185 = vpop.f32.mrf.mxu0
    %v186 = vadd.f32 %v99, %v185
    %187 = vmatmul.f32.gmra.mxu0 %v107
    %v188 = vpop.f32.mrf.mxu0
    %v189 = vadd.f32 %v99, %v188
    %190 = vmatmul.f32.gmra.mxu0 %v110
    %v191 = vpop.f32.mrf.mxu0
    %v192 = vadd.f32 %v99, %v191
    %193 = vmatmul.f32.gmra.mxu0 %v113
    %v194 = vpop.f32.mrf.mxu0
    %v195 = vadd.f32 %v99, %v194
    %196 = vmatmul.f32.gmra.mxu0 %v116
    %v197 = vpop.f32.mrf.mxu0
    %v198 = vadd.f32 %v99, %v197
    %199 = vmatmul.f32.gmra.mxu0 %v119
    %v200 = vpop.f32.mrf.mxu0
    %v201 = vadd.f32 %v99, %v200
    %202 = vmatmul.f32.gmra.mxu0 %v122
    %v203 = vpop.f32.mrf.mxu0
    %v204 = vadd.f32 %v99, %v203
    %205 = vmatmul.f32.gmra.mxu0 %v125
    %v206 = vpop.f32.mrf.mxu0
    %v207 = vadd.f32 %v99, %v206
    %208 = vdwg.mxu0
    %v209 = vmax.f32 %v145, 0.0
    %v210 = vmax.f32 %v186, 0.0
    %v211 = vmax.f32 %v148, 0.0
    %v212 = vmax.f32 %v189, 0.0
    %v213 = vmax.f32 %v151, 0.0
    %v214 = vmax.f32 %v192, 0.0
    %v215 = vmax.f32 %v154, 0.0
    %v216 = vmax.f32 %v195, 0.0
    %v217 = vmax.f32 %v157, 0.0
    %v218 = vmax.f32 %v198, 0.0
    %v219 = vmax.f32 %v160, 0.0
    %v220 = vmax.f32 %v201, 0.0
    %v221 = vmax.f32 %v163, 0.0
    %v222 = vmax.f32 %v204, 0.0
    %v223 = vmax.f32 %v166, 0.0
    %v224 = vmax.f32 %v207, 0.0
    %v225 = vld [vmem:[#allocation2] sm:$0xff]
    %v226 = vld [vmem:[#allocation2 + $0x8] sm:$0xff]
    %v227 = vld [vmem:[#allocation2 + $0x10] sm:$0xff]
    %v228 = vld [vmem:[#allocation2 + $0x18] sm:$0xff]
    %v229 = vld [vmem:[#allocation2 + $0x20] sm:$0xff]
    %v230 = vld [vmem:[#allocation2 + $0x28] sm:$0xff]
    %v231 = vld [vmem:[#allocation2 + $0x30] sm:$0xff]
    %v232 = vld [vmem:[#allocation2 + $0x38] sm:$0xff]
    %v233 = vld [vmem:[#allocation2 + $0x40] sm:$0xff]
    %v234 = vld [vmem:[#allocation2 + $0x48] sm:$0xff]
    %v235 = vld [vmem:[#allocation2 + $0x50] sm:$0xff]
    %v236 = vld [vmem:[#allocation2 + $0x58] sm:$0xff]
    %v237 = vld [vmem:[#allocation2 + $0x60] sm:$0xff]
    %v238 = vld [vmem:[#allocation2 + $0x68] sm:$0xff]
    %v239 = vld [vmem:[#allocation2 + $0x70] sm:$0xff]
    %v240 = vld [vmem:[#allocation2 + $0x78] sm:$0xff]
    %v241 = vld [vmem:[#allocation2 + $0x80] sm:$0xff]
    %v242 = vld [vmem:[#allocation2 + $0x88] sm:$0xff]
    %v243 = vld [vmem:[#allocation2 + $0x90] sm:$0xff]
    %v244 = vld [vmem:[#allocation2 + $0x98] sm:$0xff]
    %v245 = vld [vmem:[#allocation2 + $0xa0] sm:$0xff]
    %v246 = vld [vmem:[#allocation2 + $0xa8] sm:$0xff]
    %v247 = vld [vmem:[#allocation2 + $0xb0] sm:$0xff]
    %v248 = vld [vmem:[#allocation2 + $0xb8] sm:$0xff]
    %v249 = vld [vmem:[#allocation2 + $0xc0] sm:$0xff]
    %v250 = vld [vmem:[#allocation2 + $0xc8] sm:$0xff]
    %v251 = vld [vmem:[#allocation2 + $0xd0] sm:$0xff]
    %v252 = vld [vmem:[#allocation2 + $0xd8] sm:$0xff]
    %v253 = vld [vmem:[#allocation2 + $0xe0] sm:$0xff]
    %v254 = vld [vmem:[#allocation2 + $0xe8] sm:$0xff]
    %v255 = vld [vmem:[#allocation2 + $0xf0] sm:$0xff]
    %v256 = vld [vmem:[#allocation2 + $0xf8] sm:$0xff]
    %v257 = vld [vmem:[%s4] sm:$0x1]
    %v259 = vperm.slane %v257, 0
    %261 = vmatpush.msra.mxu0 %v240
    %262 = vmatpush.msra.mxu0 %v239
    %263 = vmatpush.msra.mxu0 %v238
    %264 = vmatpush.msra.mxu0 %v237
    %265 = vmatpush.msra.mxu0 %v236
    %266 = vmatpush.msra.mxu0 %v235
    %267 = vmatpush.msra.mxu0 %v234
    %268 = vmatpush.msra.mxu0 %v233
    %269 = vmatpush.msra.mxu0 %v232
    %270 = vmatpush.msra.mxu0 %v231
    %271 = vmatpush.msra.mxu0 %v230
    %272 = vmatpush.msra.mxu0 %v229
    %273 = vmatpush.msra.mxu0 %v228
    %274 = vmatpush.msra.mxu0 %v227
    %275 = vmatpush.msra.mxu0 %v226
    %276 = vmatpush.msra.mxu0 %v225
    %277 = vmatmul.f32.gmra.mxu0 %v209
    %v278 = vpop.f32.mrf.mxu0
    %v279 = vadd.f32 %v259, %v278
    %280 = vmatmul.f32.gmra.mxu0 %v211
    %v281 = vpop.f32.mrf.mxu0
    %v282 = vadd.f32 %v259, %v281
    %283 = vmatmul.f32.gmra.mxu0 %v213
    %v284 = vpop.f32.mrf.mxu0
    %v285 = vadd.f32 %v259, %v284
    %286 = vmatmul.f32.gmra.mxu0 %v215
    %v287 = vpop.f32.mrf.mxu0
    %v288 = vadd.f32 %v259, %v287
    %289 = vmatmul.f32.gmra.mxu0 %v217
    %v290 = vpop.f32.mrf.mxu0
    %v291 = vadd.f32 %v259, %v290
    %292 = vmatmul.f32.gmra.mxu0 %v219
    %v293 = vpop.f32.mrf.mxu0
    %v294 = vadd.f32 %v259, %v293
    %295 = vmatmul.f32.gmra.mxu0 %v221
    %v296 = vpop.f32.mrf.mxu0
    %v297 = vadd.f32 %v259, %v296
    %298 = vmatmul.f32.gmra.mxu0 %v223
    %v299 = vpop.f32.mrf.mxu0
    %v300 = vadd.f32 %v259, %v299
    %301 = vdwg.mxu0
    %302 = vmatpush.msra.mxu0 %v256
    %303 = vmatpush.msra.mxu0 %v255
    %304 = vmatpush.msra.mxu0 %v254
    %305 = vmatpush.msra.mxu0 %v253
    %306 = vmatpush.msra.mxu0 %v252
    %307 = vmatpush.msra.mxu0 %v251
    %308 = vmatpush.msra.mxu0 %v250
    %309 = vmatpush.msra.mxu0 %v249
    %310 = vmatpush.msra.mxu0 %v248
    %311 = vmatpush.msra.mxu0 %v247
    %312 = vmatpush.msra.mxu0 %v246
    %313 = vmatpush.msra.mxu0 %v245
    %314 = vmatpush.msra.mxu0 %v244
    %315 = vmatpush.msra.mxu0 %v243
    %316 = vmatpush.msra.mxu0 %v242
    %317 = vmatpush.msra.mxu0 %v241
    %318 = vmatmul.f32.gmra.mxu0 %v210
    %v319 = vpop.f32.mrf.mxu0
    %v320 = vadd.f32 %v279, %v319
    %321 = vmatmul.f32.gmra.mxu0 %v212
    %v322 = vpop.f32.mrf.mxu0
    %v323 = vadd.f32 %v282, %v322
    %324 = vmatmul.f32.gmra.mxu0 %v214
    %v325 = vpop.f32.mrf.mxu0
    %v326 = vadd.f32 %v285, %v325
    %327 = vmatmul.f32.gmra.mxu0 %v216
    %v328 = vpop.f32.mrf.mxu0
    %v329 = vadd.f32 %v288, %v328
    %330 = vmatmul.f32.gmra.mxu0 %v218
    %v331 = vpop.f32.mrf.mxu0
    %v332 = vadd.f32 %v291, %v331
    %333 = vmatmul.f32.gmra.mxu0 %v220
    %v334 = vpop.f32.mrf.mxu0
    %v335 = vadd.f32 %v294, %v334
    %336 = vmatmul.f32.gmra.mxu0 %v222
    %v337 = vpop.f32.mrf.mxu0
    %v338 = vadd.f32 %v297, %v337
    %339 = vmatmul.f32.gmra.mxu0 %v224
    %v340 = vpop.f32.mrf.mxu0
    %v341 = vadd.f32 %v300, %v340
    %342 = vdwg.mxu0
    %v343 = vld [vmem:[#allocation5] sm:$0xff]
    %v344 = vld [vmem:[#allocation5 + $0x8] sm:$0xff]
    %v345 = vld [vmem:[#allocation5 + $0x10] sm:$0xff]
    %v346 = vld [vmem:[#allocation5 + $0x18] sm:$0xff]
    %v347 = vld [vmem:[#allocation5 + $0x20] sm:$0xff]
    %v348 = vld [vmem:[#allocation5 + $0x28] sm:$0xff]
    %v349 = vld [vmem:[#allocation5 + $0x30] sm:$0xff]
    %v350 = vld [vmem:[#allocation5 + $0x38] sm:$0xff]
    %v351 = vld [vmem:[#allocation5 + $0x40] sm:$0xff]
    %v352 = vld [vmem:[#allocation5 + $0x48] sm:$0xff]
    %v353 = vld [vmem:[#allocation5 + $0x50] sm:$0xff]
    %v354 = vld [vmem:[#allocation5 + $0x58] sm:$0xff]
    %v355 = vld [vmem:[#allocation5 + $0x60] sm:$0xff]
    %v356 = vld [vmem:[#allocation5 + $0x68] sm:$0xff]
    %v357 = vld [vmem:[#allocation5 + $0x70] sm:$0xff]
    %v358 = vld [vmem:[#allocation5 + $0x78] sm:$0xff]
    %s359 = scalar_lea.vmem [#allocation5], 128
    %v360 = vld [vmem:[%s359] sm:$0xff]
    %v361 = vld [vmem:[%s359 + $0x8] sm:$0xff]
    %v362 = vld [vmem:[%s359 + $0x10] sm:$0xff]
    %v363 = vld [vmem:[%s359 + $0x18] sm:$0xff]
    %v364 = vld [vmem:[%s359 + $0x20] sm:$0xff]
    %v365 = vld [vmem:[%s359 + $0x28] sm:$0xff]
    %v366 = vld [vmem:[%s359 + $0x30] sm:$0xff]
    %v367 = vld [vmem:[%s359 + $0x38] sm:$0xff]
    %v368 = vld [vmem:[%s359 + $0x40] sm:$0xff]
    %v369 = vld [vmem:[%s359 + $0x48] sm:$0xff]
    %v370 = vld [vmem:[%s359 + $0x50] sm:$0xff]
    %v371 = vld [vmem:[%s359 + $0x58] sm:$0xff]
    %v372 = vld [vmem:[%s359 + $0x60] sm:$0xff]
    %v373 = vld [vmem:[%s359 + $0x68] sm:$0xff]
    %v374 = vld [vmem:[%s359 + $0x70] sm:$0xff]
    %v375 = vld [vmem:[%s359 + $0x78] sm:$0xff]
    %v376 = vld [vmem:[%s6] sm:$0x1]
    %v377 = vrot.slane %v320, 4
    %v378 = vmax.f32 %v320, %v377
    %v379 = vrot.slane %v378, 2
    %v380 = vmax.f32 %v378, %v379
    %v381 = vrot.slane %v380, 1
    %v382 = vmax.f32 %v380, %v381
    %v383 = vrot.slane %v323, 4
    %v384 = vmax.f32 %v323, %v383
    %v385 = vrot.slane %v384, 2
    %v386 = vmax.f32 %v384, %v385
    %v387 = vrot.slane %v386, 1
    %v388 = vmax.f32 %v386, %v387
    %v389 = vrot.slane %v326, 4
    %v390 = vmax.f32 %v326, %v389
    %v391 = vrot.slane %v390, 2
    %v392 = vmax.f32 %v390, %v391
    %v393 = vrot.slane %v392, 1
    %v394 = vmax.f32 %v392, %v393
    %v395 = vrot.slane %v329, 4
    %v396 = vmax.f32 %v329, %v395
    %v397 = vrot.slane %v396, 2
    %v398 = vmax.f32 %v396, %v397
    %v399 = vrot.slane %v398, 1
    %v400 = vmax.f32 %v398, %v399
    %v401 = vrot.slane %v332, 4
    %v402 = vmax.f32 %v332, %v401
    %v403 = vrot.slane %v402, 2
    %v404 = vmax.f32 %v402, %v403
    %v405 = vrot.slane %v404, 1
    %v406 = vmax.f32 %v404, %v405
    %v407 = vrot.slane %v335, 4
    %v408 = vmax.f32 %v335, %v407
    %v409 = vrot.slane %v408, 2
    %v410 = vmax.f32 %v408, %v409
    %v411 = vrot.slane %v410, 1
    %v412 = vmax.f32 %v410, %v411
    %v413 = vrot.slane %v338, 4
    %v414 = vmax.f32 %v338, %v413
    %v415 = vrot.slane %v414, 2
    %v416 = vmax.f32 %v414, %v415
    %v417 = vrot.slane %v416, 1
    %v418 = vmax.f32 %v416, %v417
    %v419 = vrot.slane %v341, 4
    %v420 = vmax.f32 %v341, %v419
    %v421 = vrot.slane %v420, 2
    %v422 = vmax.f32 %v420, %v421
    %v423 = vrot.slane %v422, 1
    %v424 = vmax.f32 %v422, %v423
    %v425 = vmax.f32 %v320, 0.0
    %v426 = vmax.f32 %v323, 0.0
    %v427 = vmax.f32 %v326, 0.0
    %v428 = vmax.f32 %v329, 0.0
    %v429 = vmax.f32 %v332, 0.0
    %v430 = vmax.f32 %v335, 0.0
    %v431 = vmax.f32 %v338, 0.0
    %v432 = vmax.f32 %v341, 0.0
    %433 = vmatpush.msra.mxu0 %v358
    %434 = vmatpush.msra.mxu0 %v357
    %435 = vmatpush.msra.mxu0 %v356
    %436 = vmatpush.msra.mxu0 %v355
    %437 = vmatpush.msra.mxu0 %v354
    %438 = vmatpush.msra.mxu0 %v353
    %439 = vmatpush.msra.mxu0 %v352
    %440 = vmatpush.msra.mxu0 %v351
    %441 = vmatpush.msra.mxu0 %v350
    %442 = vmatpush.msra.mxu0 %v349
    %443 = vmatpush.msra.mxu0 %v348
    %444 = vmatpush.msra.mxu0 %v347
    %445 = vmatpush.msra.mxu0 %v346
    %446 = vmatpush.msra.mxu0 %v345
    %447 = vmatpush.msra.mxu0 %v344
    %448 = vmatpush.msra.mxu0 %v343
    %449 = vmatmul.f32.gmra.mxu0 %v425
    %v450 = vpop.f32.mrf.mxu0
    %v451 = vadd.f32 0.0, %v450
    %452 = vmatmul.f32.gmra.mxu0 %v426
    %v453 = vpop.f32.mrf.mxu0
    %v454 = vadd.f32 0.0, %v453
    %455 = vmatmul.f32.gmra.mxu0 %v427
    %v456 = vpop.f32.mrf.mxu0
    %v457 = vadd.f32 0.0, %v456
    %458 = vmatmul.f32.gmra.mxu0 %v428
    %v459 = vpop.f32.mrf.mxu0
    %v460 = vadd.f32 0.0, %v459
    %461 = vmatmul.f32.gmra.mxu0 %v429
    %v462 = vpop.f32.mrf.mxu0
    %v463 = vadd.f32 0.0, %v462
    %464 = vmatmul.f32.gmra.mxu0 %v430
    %v465 = vpop.f32.mrf.mxu0
    %v466 = vadd.f32 0.0, %v465
    %467 = vmatmul.f32.gmra.mxu0 %v431
    %v468 = vpop.f32.mrf.mxu0
    %v469 = vadd.f32 0.0, %v468
    %470 = vmatmul.f32.gmra.mxu0 %v432
    %v471 = vpop.f32.mrf.mxu0
    %v472 = vadd.f32 0.0, %v471
    %473 = vdwg.mxu0
    %v474 = vmax.f32 %v382, 0.0
    %v475 = vmax.f32 %v388, 0.0
    %v476 = vmax.f32 %v394, 0.0
    %v477 = vmax.f32 %v400, 0.0
    %v478 = vmax.f32 %v406, 0.0
    %v479 = vmax.f32 %v412, 0.0
    %v480 = vmax.f32 %v418, 0.0
    %v481 = vmax.f32 %v424, 0.0
    %v482 = vperm.slane %v376, 0
    %vm491 = vcmask 1041409
    %v492 = vsel %vm491, %v475, %v474
    %vm493 = vcmask 1042434
    %v494 = vsel %vm493, %v476, %v492
    %vm495 = vcmask 1043459
    %v496 = vsel %vm495, %v477, %v494
    %vm497 = vcmask 1044484
    %v498 = vsel %vm497, %v478, %v496
    %vm499 = vcmask 1045509
    %v500 = vsel %vm499, %v479, %v498
    %vm501 = vcmask 1046534
    %v502 = vsel %vm501, %v480, %v500
    %vm503 = vcmask 1047559
    %v504 = vsel %vm503, %v481, %v502
    %506 = vmatpush.msra.mxu0 %v375
    %507 = vmatpush.msra.mxu0 %v374
    %508 = vmatpush.msra.mxu0 %v373
    %509 = vmatpush.msra.mxu0 %v372
    %510 = vmatpush.msra.mxu0 %v371
    %511 = vmatpush.msra.mxu0 %v370
    %512 = vmatpush.msra.mxu0 %v369
    %513 = vmatpush.msra.mxu0 %v368
    %514 = vmatpush.msra.mxu0 %v367
    %515 = vmatpush.msra.mxu0 %v366
    %516 = vmatpush.msra.mxu0 %v365
    %517 = vmatpush.msra.mxu0 %v364
    %518 = vmatpush.msra.mxu0 %v363
    %519 = vmatpush.msra.mxu0 %v362
    %520 = vmatpush.msra.mxu0 %v361
    %521 = vmatpush.msra.mxu0 %v360
    %522 = vmatmul.f32.gmra.mxu0 %v504
    %v523 = vpop.f32.mrf.mxu0
    %v524 = vadd.f32 %v482, %v523
    %525 = vdwg.mxu0
    %v527 = vrot.slane %v524, 1
    %v528 = vrot.slane %v524, 2
    %v529 = vrot.slane %v524, 3
    %v530 = vrot.slane %v524, 4
    %v531 = vrot.slane %v524, 5
    %v532 = vrot.slane %v524, 6
    %v533 = vrot.slane %v524, 7
    %v534 = vperm.slane %v524, 0
    %v535 = vperm.slane %v527, 0
    %v536 = vperm.slane %v528, 0
    %v537 = vperm.slane %v529, 0
    %v538 = vperm.slane %v530, 0
    %v539 = vperm.slane %v531, 0
    %v540 = vperm.slane %v532, 0
    %v541 = vperm.slane %v533, 0
    %v550 = vadd.f32 %v451, %v534
    %v551 = vadd.f32 %v454, %v535
    %v552 = vadd.f32 %v457, %v536
    %v553 = vadd.f32 %v460, %v537
    %v554 = vadd.f32 %v463, %v538
    %v555 = vadd.f32 %v466, %v539
    %v556 = vadd.f32 %v469, %v540
    %v557 = vadd.f32 %v472, %v541
    %s558 = scalar_lea.vmem [#allocation5], 256
    %v559 = vld [vmem:[%s558] sm:$0xff]
    %v560 = vld [vmem:[%s558 + $0x8] sm:$0xff]
    %v561 = vld [vmem:[%s558 + $0x10] sm:$0xff]
    %v562 = vld [vmem:[%s558 + $0x18] sm:$0xff]
    %v563 = vld [vmem:[%s558 + $0x20] sm:$0xff]
    %v564 = vld [vmem:[%s558 + $0x28] sm:$0xff]
    %v565 = vld [vmem:[%s558 + $0x30] sm:$0xff]
    %v566 = vld [vmem:[%s558 + $0x38] sm:$0xff]
    %v567 = vld [vmem:[%s558 + $0x40] sm:$0xff]
    %v568 = vld [vmem:[%s558 + $0x48] sm:$0xff]
    %v569 = vld [vmem:[%s558 + $0x50] sm:$0xff]
    %v570 = vld [vmem:[%s558 + $0x58] sm:$0xff]
    %v571 = vld [vmem:[%s558 + $0x60] sm:$0xff]
    %v572 = vld [vmem:[%s558 + $0x68] sm:$0xff]
    %v573 = vld [vmem:[%s558 + $0x70] sm:$0xff]
    %v574 = vld [vmem:[%s558 + $0x78] sm:$0xff]
    %s575 = scalar_lea.vmem [#allocation5], 384
    %v576 = vld [vmem:[%s575] sm:$0xff]
    %v577 = vld [vmem:[%s575 + $0x8] sm:$0xff]
    %v578 = vld [vmem:[%s575 + $0x10] sm:$0xff]
    %v579 = vld [vmem:[%s575 + $0x18] sm:$0xff]
    %v580 = vld [vmem:[%s575 + $0x20] sm:$0xff]
    %v581 = vld [vmem:[%s575 + $0x28] sm:$0xff]
    %v582 = vld [vmem:[%s575 + $0x30] sm:$0xff]
    %v583 = vld [vmem:[%s575 + $0x38] sm:$0xff]
    %v584 = vld [vmem:[%s575 + $0x40] sm:$0xff]
    %v585 = vld [vmem:[%s575 + $0x48] sm:$0xff]
    %v586 = vld [vmem:[%s575 + $0x50] sm:$0xff]
    %v587 = vld [vmem:[%s575 + $0x58] sm:$0xff]
    %v588 = vld [vmem:[%s575 + $0x60] sm:$0xff]
    %v589 = vld [vmem:[%s575 + $0x68] sm:$0xff]
    %v590 = vld [vmem:[%s575 + $0x70] sm:$0xff]
    %v591 = vld [vmem:[%s575 + $0x78] sm:$0xff]
    %v592 = vld [vmem:[%s6 + $0x1] sm:$0x1]
    %v593 = vrot.slane %v550, 4
    %v594 = vmax.f32 %v550, %v593
    %v595 = vrot.slane %v594, 2
    %v596 = vmax.f32 %v594, %v595
    %v597 = vrot.slane %v596, 1
    %v598 = vmax.f32 %v596, %v597
    %v599 = vrot.slane %v551, 4
    %v600 = vmax.f32 %v551, %v599
    %v601 = vrot.slane %v600, 2
    %v602 = vmax.f32 %v600, %v601
    %v603 = vrot.slane %v602, 1
    %v604 = vmax.f32 %v602, %v603
    %v605 = vrot.slane %v552, 4
    %v606 = vmax.f32 %v552, %v605
    %v607 = vrot.slane %v606, 2
    %v608 = vmax.f32 %v606, %v607
    %v609 = vrot.slane %v608, 1
    %v610 = vmax.f32 %v608, %v609
    %v611 = vrot.slane %v553, 4
    %v612 = vmax.f32 %v553, %v611
    %v613 = vrot.slane %v612, 2
    %v614 = vmax.f32 %v612, %v613
    %v615 = vrot.slane %v614, 1
    %v616 = vmax.f32 %v614, %v615
    %v617 = vrot.slane %v554, 4
    %v618 = vmax.f32 %v554, %v617
    %v619 = vrot.slane %v618, 2
    %v620 = vmax.f32 %v618, %v619
    %v621 = vrot.slane %v620, 1
    %v622 = vmax.f32 %v620, %v621
    %v623 = vrot.slane %v555, 4
    %v624 = vmax.f32 %v555, %v623
    %v625 = vrot.slane %v624, 2
    %v626 = vmax.f32 %v624, %v625
    %v627 = vrot.slane %v626, 1
    %v628 = vmax.f32 %v626, %v627
    %v629 = vrot.slane %v556, 4
    %v630 = vmax.f32 %v556, %v629
    %v631 = vrot.slane %v630, 2
    %v632 = vmax.f32 %v630, %v631
    %v633 = vrot.slane %v632, 1
    %v634 = vmax.f32 %v632, %v633
    %v635 = vrot.slane %v557, 4
    %v636 = vmax.f32 %v557, %v635
    %v637 = vrot.slane %v636, 2
    %v638 = vmax.f32 %v636, %v637
    %v639 = vrot.slane %v638, 1
    %v640 = vmax.f32 %v638, %v639
    %v641 = vmax.f32 %v550, 0.0
    %v642 = vmax.f32 %v551, 0.0
    %v643 = vmax.f32 %v552, 0.0
    %v644 = vmax.f32 %v553, 0.0
    %v645 = vmax.f32 %v554, 0.0
    %v646 = vmax.f32 %v555, 0.0
    %v647 = vmax.f32 %v556, 0.0
    %v648 = vmax.f32 %v557, 0.0
    %649 = vmatpush.msra.mxu0 %v574
    %650 = vmatpush.msra.mxu0 %v573
    %651 = vmatpush.msra.mxu0 %v572
    %652 = vmatpush.msra.mxu0 %v571
    %653 = vmatpush.msra.mxu0 %v570
    %654 = vmatpush.msra.mxu0 %v569
    %655 = vmatpush.msra.mxu0 %v568
    %656 = vmatpush.msra.mxu0 %v567
    %657 = vmatpush.msra.mxu0 %v566
    %658 = vmatpush.msra.mxu0 %v565
    %659 = vmatpush.msra.mxu0 %v564
    %660 = vmatpush.msra.mxu0 %v563
    %661 = vmatpush.msra.mxu0 %v562
    %662 = vmatpush.msra.mxu0 %v561
    %663 = vmatpush.msra.mxu0 %v560
    %664 = vmatpush.msra.mxu0 %v559
    %665 = vmatmul.f32.gmra.mxu0 %v641
    %v666 = vpop.f32.mrf.mxu0
    %v667 = vadd.f32 0.0, %v666
    %668 = vmatmul.f32.gmra.mxu0 %v642
    %v669 = vpop.f32.mrf.mxu0
    %v670 = vadd.f32 0.0, %v669
    %671 = vmatmul.f32.gmra.mxu0 %v643
    %v672 = vpop.f32.mrf.mxu0
    %v673 = vadd.f32 0.0, %v672
    %674 = vmatmul.f32.gmra.mxu0 %v644
    %v675 = vpop.f32.mrf.mxu0
    %v676 = vadd.f32 0.0, %v675
    %677 = vmatmul.f32.gmra.mxu0 %v645
    %v678 = vpop.f32.mrf.mxu0
    %v679 = vadd.f32 0.0, %v678
    %680 = vmatmul.f32.gmra.mxu0 %v646
    %v681 = vpop.f32.mrf.mxu0
    %v682 = vadd.f32 0.0, %v681
    %683 = vmatmul.f32.gmra.mxu0 %v647
    %v684 = vpop.f32.mrf.mxu0
    %v685 = vadd.f32 0.0, %v684
    %686 = vmatmul.f32.gmra.mxu0 %v648
    %v687 = vpop.f32.mrf.mxu0
    %v688 = vadd.f32 0.0, %v687
    %689 = vdwg.mxu0
    %v690 = vmax.f32 %v598, 0.0
    %v691 = vmax.f32 %v604, 0.0
    %v692 = vmax.f32 %v610, 0.0
    %v693 = vmax.f32 %v616, 0.0
    %v694 = vmax.f32 %v622, 0.0
    %v695 = vmax.f32 %v628, 0.0
    %v696 = vmax.f32 %v634, 0.0
    %v697 = vmax.f32 %v640, 0.0
    %v698 = vperm.slane %v592, 0
    %v707 = vsel %vm491, %v691, %v690
    %v708 = vsel %vm493, %v692, %v707
    %v709 = vsel %vm495, %v693, %v708
    %v710 = vsel %vm497, %v694, %v709
    %v711 = vsel %vm499, %v695, %v710
    %v712 = vsel %vm501, %v696, %v711
    %v713 = vsel %vm503, %v697, %v712
    %715 = vmatpush.msra.mxu0 %v591
    %716 = vmatpush.msra.mxu0 %v590
    %717 = vmatpush.msra.mxu0 %v589
    %718 = vmatpush.msra.mxu0 %v588
    %719 = vmatpush.msra.mxu0 %v587
    %720 = vmatpush.msra.mxu0 %v586
    %721 = vmatpush.msra.mxu0 %v585
    %722 = vmatpush.msra.mxu0 %v584
    %723 = vmatpush.msra.mxu0 %v583
    %724 = vmatpush.msra.mxu0 %v582
    %725 = vmatpush.msra.mxu0 %v581
    %726 = vmatpush.msra.mxu0 %v580
    %727 = vmatpush.msra.mxu0 %v579
    %728 = vmatpush.msra.mxu0 %v578
    %729 = vmatpush.msra.mxu0 %v577
    %730 = vmatpush.msra.mxu0 %v576
    %731 = vmatmul.f32.gmra.mxu0 %v713
    %v732 = vpop.f32.mrf.mxu0
    %v733 = vadd.f32 %v698, %v732
    %734 = vdwg.mxu0
    %v736 = vrot.slane %v733, 1
    %v737 = vrot.slane %v733, 2
    %v738 = vrot.slane %v733, 3
    %v739 = vrot.slane %v733, 4
    %v740 = vrot.slane %v733, 5
    %v741 = vrot.slane %v733, 6
    %v742 = vrot.slane %v733, 7
    %v743 = vperm.slane %v733, 0
    %v744 = vperm.slane %v736, 0
    %v745 = vperm.slane %v737, 0
    %v746 = vperm.slane %v738, 0
    %v747 = vperm.slane %v739, 0
    %v748 = vperm.slane %v740, 0
    %v749 = vperm.slane %v741, 0
    %v750 = vperm.slane %v742, 0
    %v759 = vadd.f32 %v667, %v743
    %v760 = vadd.f32 %v670, %v744
    %v761 = vadd.f32 %v673, %v745
    %v762 = vadd.f32 %v676, %v746
    %v763 = vadd.f32 %v679, %v747
    %v764 = vadd.f32 %v682, %v748
    %v765 = vadd.f32 %v685, %v749
    %v766 = vadd.f32 %v688, %v750
    %s767 = scalar_lea.vmem [#allocation5], 512
    %v768 = vld [vmem:[%s767] sm:$0xff]
    %v769 = vld [vmem:[%s767 + $0x8] sm:$0xff]
    %v770 = vld [vmem:[%s767 + $0x10] sm:$0xff]
    %v771 = vld [vmem:[%s767 + $0x18] sm:$0xff]
    %v772 = vld [vmem:[%s767 + $0x20] sm:$0xff]
    %v773 = vld [vmem:[%s767 + $0x28] sm:$0xff]
    %v774 = vld [vmem:[%s767 + $0x30] sm:$0xff]
    %v775 = vld [vmem:[%s767 + $0x38] sm:$0xff]
    %v776 = vld [vmem:[%s767 + $0x40] sm:$0xff]
    %v777 = vld [vmem:[%s767 + $0x48] sm:$0xff]
    %v778 = vld [vmem:[%s767 + $0x50] sm:$0xff]
    %v779 = vld [vmem:[%s767 + $0x58] sm:$0xff]
    %v780 = vld [vmem:[%s767 + $0x60] sm:$0xff]
    %v781 = vld [vmem:[%s767 + $0x68] sm:$0xff]
    %v782 = vld [vmem:[%s767 + $0x70] sm:$0xff]
    %v783 = vld [vmem:[%s767 + $0x78] sm:$0xff]
    %s784 = scalar_lea.vmem [#allocation5], 640
    %v785 = vld [vmem:[%s784] sm:$0xff]
    %v786 = vld [vmem:[%s784 + $0x8] sm:$0xff]
    %v787 = vld [vmem:[%s784 + $0x10] sm:$0xff]
    %v788 = vld [vmem:[%s784 + $0x18] sm:$0xff]
    %v789 = vld [vmem:[%s784 + $0x20] sm:$0xff]
    %v790 = vld [vmem:[%s784 + $0x28] sm:$0xff]
    %v791 = vld [vmem:[%s784 + $0x30] sm:$0xff]
    %v792 = vld [vmem:[%s784 + $0x38] sm:$0xff]
    %v793 = vld [vmem:[%s784 + $0x40] sm:$0xff]
    %v794 = vld [vmem:[%s784 + $0x48] sm:$0xff]
    %v795 = vld [vmem:[%s784 + $0x50] sm:$0xff]
    %v796 = vld [vmem:[%s784 + $0x58] sm:$0xff]
    %v797 = vld [vmem:[%s784 + $0x60] sm:$0xff]
    %v798 = vld [vmem:[%s784 + $0x68] sm:$0xff]
    %v799 = vld [vmem:[%s784 + $0x70] sm:$0xff]
    %v800 = vld [vmem:[%s784 + $0x78] sm:$0xff]
    %v801 = vld [vmem:[%s6 + $0x2] sm:$0x1]
    %v802 = vrot.slane %v759, 4
    %v803 = vmax.f32 %v759, %v802
    %v804 = vrot.slane %v803, 2
    %v805 = vmax.f32 %v803, %v804
    %v806 = vrot.slane %v805, 1
    %v807 = vmax.f32 %v805, %v806
    %v808 = vrot.slane %v760, 4
    %v809 = vmax.f32 %v760, %v808
    %v810 = vrot.slane %v809, 2
    %v811 = vmax.f32 %v809, %v810
    %v812 = vrot.slane %v811, 1
    %v813 = vmax.f32 %v811, %v812
    %v814 = vrot.slane %v761, 4
    %v815 = vmax.f32 %v761, %v814
    %v816 = vrot.slane %v815, 2
    %v817 = vmax.f32 %v815, %v816
    %v818 = vrot.slane %v817, 1
    %v819 = vmax.f32 %v817, %v818
    %v820 = vrot.slane %v762, 4
    %v821 = vmax.f32 %v762, %v820
    %v822 = vrot.slane %v821, 2
    %v823 = vmax.f32 %v821, %v822
    %v824 = vrot.slane %v823, 1
    %v825 = vmax.f32 %v823, %v824
    %v826 = vrot.slane %v763, 4
    %v827 = vmax.f32 %v763, %v826
    %v828 = vrot.slane %v827, 2
    %v829 = vmax.f32 %v827, %v828
    %v830 = vrot.slane %v829, 1
    %v831 = vmax.f32 %v829, %v830
    %v832 = vrot.slane %v764, 4
    %v833 = vmax.f32 %v764, %v832
    %v834 = vrot.slane %v833, 2
    %v835 = vmax.f32 %v833, %v834
    %v836 = vrot.slane %v835, 1
    %v837 = vmax.f32 %v835, %v836
    %v838 = vrot.slane %v765, 4
    %v839 = vmax.f32 %v765, %v838
    %v840 = vrot.slane %v839, 2
    %v841 = vmax.f32 %v839, %v840
    %v842 = vrot.slane %v841, 1
    %v843 = vmax.f32 %v841, %v842
    %v844 = vrot.slane %v766, 4
    %v845 = vmax.f32 %v766, %v844
    %v846 = vrot.slane %v845, 2
    %v847 = vmax.f32 %v845, %v846
    %v848 = vrot.slane %v847, 1
    %v849 = vmax.f32 %v847, %v848
    %v850 = vmax.f32 %v759, 0.0
    %v851 = vmax.f32 %v760, 0.0
    %v852 = vmax.f32 %v761, 0.0
    %v853 = vmax.f32 %v762, 0.0
    %v854 = vmax.f32 %v763, 0.0
    %v855 = vmax.f32 %v764, 0.0
    %v856 = vmax.f32 %v765, 0.0
    %v857 = vmax.f32 %v766, 0.0
    %858 = vmatpush.msra.mxu0 %v783
    %859 = vmatpush.msra.mxu0 %v782
    %860 = vmatpush.msra.mxu0 %v781
    %861 = vmatpush.msra.mxu0 %v780
    %862 = vmatpush.msra.mxu0 %v779
    %863 = vmatpush.msra.mxu0 %v778
    %864 = vmatpush.msra.mxu0 %v777
    %865 = vmatpush.msra.mxu0 %v776
    %866 = vmatpush.msra.mxu0 %v775
    %867 = vmatpush.msra.mxu0 %v774
    %868 = vmatpush.msra.mxu0 %v773
    %869 = vmatpush.msra.mxu0 %v772
    %870 = vmatpush.msra.mxu0 %v771
    %871 = vmatpush.msra.mxu0 %v770
    %872 = vmatpush.msra.mxu0 %v769
    %873 = vmatpush.msra.mxu0 %v768
    %874 = vmatmul.f32.gmra.mxu0 %v850
    %v875 = vpop.f32.mrf.mxu0
    %v876 = vadd.f32 0.0, %v875
    %877 = vmatmul.f32.gmra.mxu0 %v851
    %v878 = vpop.f32.mrf.mxu0
    %v879 = vadd.f32 0.0, %v878
    %880 = vmatmul.f32.gmra.mxu0 %v852
    %v881 = vpop.f32.mrf.mxu0
    %v882 = vadd.f32 0.0, %v881
    %883 = vmatmul.f32.gmra.mxu0 %v853
    %v884 = vpop.f32.mrf.mxu0
    %v885 = vadd.f32 0.0, %v884
    %886 = vmatmul.f32.gmra.mxu0 %v854
    %v887 = vpop.f32.mrf.mxu0
    %v888 = vadd.f32 0.0, %v887
    %889 = vmatmul.f32.gmra.mxu0 %v855
    %v890 = vpop.f32.mrf.mxu0
    %v891 = vadd.f32 0.0, %v890
    %892 = vmatmul.f32.gmra.mxu0 %v856
    %v893 = vpop.f32.mrf.mxu0
    %v894 = vadd.f32 0.0, %v893
    %895 = vmatmul.f32.gmra.mxu0 %v857
    %v896 = vpop.f32.mrf.mxu0
    %v897 = vadd.f32 0.0, %v896
    %898 = vdwg.mxu0
    %v899 = vmax.f32 %v807, 0.0
    %v900 = vmax.f32 %v813, 0.0
    %v901 = vmax.f32 %v819, 0.0
    %v902 = vmax.f32 %v825, 0.0
    %v903 = vmax.f32 %v831, 0.0
    %v904 = vmax.f32 %v837, 0.0
    %v905 = vmax.f32 %v843, 0.0
    %v906 = vmax.f32 %v849, 0.0
    %v907 = vperm.slane %v801, 0
    %v916 = vsel %vm491, %v900, %v899
    %v917 = vsel %vm493, %v901, %v916
    %v918 = vsel %vm495, %v902, %v917
    %v919 = vsel %vm497, %v903, %v918
    %v920 = vsel %vm499, %v904, %v919
    %v921 = vsel %vm501, %v905, %v920
    %v922 = vsel %vm503, %v906, %v921
    %924 = vmatpush.msra.mxu0 %v800
    %925 = vmatpush.msra.mxu0 %v799
    %926 = vmatpush.msra.mxu0 %v798
    %927 = vmatpush.msra.mxu0 %v797
    %928 = vmatpush.msra.mxu0 %v796
    %929 = vmatpush.msra.mxu0 %v795
    %930 = vmatpush.msra.mxu0 %v794
    %931 = vmatpush.msra.mxu0 %v793
    %932 = vmatpush.msra.mxu0 %v792
    %933 = vmatpush.msra.mxu0 %v791
    %934 = vmatpush.msra.mxu0 %v790
    %935 = vmatpush.msra.mxu0 %v789
    %936 = vmatpush.msra.mxu0 %v788
    %937 = vmatpush.msra.mxu0 %v787
    %938 = vmatpush.msra.mxu0 %v786
    %939 = vmatpush.msra.mxu0 %v785
    %940 = vmatmul.f32.gmra.mxu0 %v922
    %v941 = vpop.f32.mrf.mxu0
    %v942 = vadd.f32 %v907, %v941
    %943 = vdwg.mxu0
    %v945 = vrot.slane %v942, 1
    %v946 = vrot.slane %v942, 2
    %v947 = vrot.slane %v942, 3
    %v948 = vrot.slane %v942, 4
    %v949 = vrot.slane %v942, 5
    %v950 = vrot.slane %v942, 6
    %v951 = vrot.slane %v942, 7
    %v952 = vperm.slane %v942, 0
    %v953 = vperm.slane %v945, 0
    %v954 = vperm.slane %v946, 0
    %v955 = vperm.slane %v947, 0
    %v956 = vperm.slane %v948, 0
    %v957 = vperm.slane %v949, 0
    %v958 = vperm.slane %v950, 0
    %v959 = vperm.slane %v951, 0
    %v968 = vadd.f32 %v876, %v952
    %v969 = vadd.f32 %v879, %v953
    %v970 = vadd.f32 %v882, %v954
    %v971 = vadd.f32 %v885, %v955
    %v972 = vadd.f32 %v888, %v956
    %v973 = vadd.f32 %v891, %v957
    %v974 = vadd.f32 %v894, %v958
    %v975 = vadd.f32 %v897, %v959
    %v976 = vrot.slane %v968, 4
    %v977 = vmax.f32 %v968, %v976
    %v978 = vrot.slane %v977, 2
    %v979 = vmax.f32 %v977, %v978
    %v980 = vrot.slane %v979, 1
    %v981 = vmax.f32 %v979, %v980
    %v982 = vrot.slane %v969, 4
    %v983 = vmax.f32 %v969, %v982
    %v984 = vrot.slane %v983, 2
    %v985 = vmax.f32 %v983, %v984
    %v986 = vrot.slane %v985, 1
    %v987 = vmax.f32 %v985, %v986
    %v988 = vrot.slane %v970, 4
    %v989 = vmax.f32 %v970, %v988
    %v990 = vrot.slane %v989, 2
    %v991 = vmax.f32 %v989, %v990
    %v992 = vrot.slane %v991, 1
    %v993 = vmax.f32 %v991, %v992
    %v994 = vrot.slane %v971, 4
    %v995 = vmax.f32 %v971, %v994
    %v996 = vrot.slane %v995, 2
    %v997 = vmax.f32 %v995, %v996
    %v998 = vrot.slane %v997, 1
    %v999 = vmax.f32 %v997, %v998
    %v1000 = vrot.slane %v972, 4
    %v1001 = vmax.f32 %v972, %v1000
    %v1002 = vrot.slane %v1001, 2
    %v1003 = vmax.f32 %v1001, %v1002
    %v1004 = vrot.slane %v1003, 1
    %v1005 = vmax.f32 %v1003, %v1004
    %v1006 = vrot.slane %v973, 4
    %v1007 = vmax.f32 %v973, %v1006
    %v1008 = vrot.slane %v1007, 2
    %v1009 = vmax.f32 %v1007, %v1008
    %v1010 = vrot.slane %v1009, 1
    %v1011 = vmax.f32 %v1009, %v1010
    %v1012 = vrot.slane %v974, 4
    %v1013 = vmax.f32 %v974, %v1012
    %v1014 = vrot.slane %v1013, 2
    %v1015 = vmax.f32 %v1013, %v1014
    %v1016 = vrot.slane %v1015, 1
    %v1017 = vmax.f32 %v1015, %v1016
    %v1018 = vrot.slane %v975, 4
    %v1019 = vmax.f32 %v975, %v1018
    %v1020 = vrot.slane %v1019, 2
    %v1021 = vmax.f32 %v1019, %v1020
    %v1022 = vrot.slane %v1021, 1
    %v1023 = vmax.f32 %v1021, %v1022
    %v1024 = vmax.f32 %v981, 0.0
    %v1025 = vmax.f32 %v987, 0.0
    %v1026 = vmax.f32 %v993, 0.0
    %v1027 = vmax.f32 %v999, 0.0
    %v1028 = vmax.f32 %v1005, 0.0
    %v1029 = vmax.f32 %v1011, 0.0
    %v1030 = vmax.f32 %v1017, 0.0
    %v1031 = vmax.f32 %v1023, 0.0
    %v1032 = vld [vmem:[#allocation7] sm:$0xff]
    %v1033 = vld [vmem:[#allocation7 + $0x8] sm:$0xff]
    %v1034 = vld [vmem:[#allocation7 + $0x10] sm:$0xff]
    %v1035 = vld [vmem:[#allocation7 + $0x18] sm:$0xff]
    %v1036 = vld [vmem:[#allocation7 + $0x20] sm:$0xff]
    %v1037 = vld [vmem:[#allocation7 + $0x28] sm:$0xff]
    %v1038 = vld [vmem:[#allocation7 + $0x30] sm:$0xff]
    %v1039 = vld [vmem:[#allocation7 + $0x38] sm:$0xff]
    %v1040 = vld [vmem:[#allocation7 + $0x40] sm:$0xff]
    %v1041 = vld [vmem:[#allocation7 + $0x48] sm:$0xff]
    %v1042 = vld [vmem:[#allocation7 + $0x50] sm:$0xff]
    %v1043 = vld [vmem:[#allocation7 + $0x58] sm:$0xff]
    %v1044 = vld [vmem:[#allocation7 + $0x60] sm:$0xff]
    %v1045 = vld [vmem:[#allocation7 + $0x68] sm:$0xff]
    %v1046 = vld [vmem:[#allocation7 + $0x70] sm:$0xff]
    %v1047 = vld [vmem:[#allocation7 + $0x78] sm:$0xff]
    %v1048 = vld [vmem:[%s8] sm:$0x1]
    %v1050 = vperm.slane %v1048, 0
    %v1060 = vsel %vm491, %v1025, %v1024
    %v1061 = vsel %vm493, %v1026, %v1060
    %v1062 = vsel %vm495, %v1027, %v1061
    %v1063 = vsel %vm497, %v1028, %v1062
    %v1064 = vsel %vm499, %v1029, %v1063
    %v1065 = vsel %vm501, %v1030, %v1064
    %v1066 = vsel %vm503, %v1031, %v1065
    %1068 = vmatpush.msra.mxu0 %v1047
    %1069 = vmatpush.msra.mxu0 %v1046
    %1070 = vmatpush.msra.mxu0 %v1045
    %1071 = vmatpush.msra.mxu0 %v1044
    %1072 = vmatpush.msra.mxu0 %v1043
    %1073 = vmatpush.msra.mxu0 %v1042
    %1074 = vmatpush.msra.mxu0 %v1041
    %1075 = vmatpush.msra.mxu0 %v1040
    %1076 = vmatpush.msra.mxu0 %v1039
    %1077 = vmatpush.msra.mxu0 %v1038
    %1078 = vmatpush.msra.mxu0 %v1037
    %1079 = vmatpush.msra.mxu0 %v1036
    %1080 = vmatpush.msra.mxu0 %v1035
    %1081 = vmatpush.msra.mxu0 %v1034
    %1082 = vmatpush.msra.mxu0 %v1033
    %1083 = vmatpush.msra.mxu0 %v1032
    %1084 = vmatmul.f32.gmra.mxu0 %v1066
    %v1085 = vpop.f32.mrf.mxu0
    %v1086 = vadd.f32 %v1050, %v1085
    %1087 = vdwg.mxu0
    %1088 = vst [vmem:[#allocation8] sm:$0xff] %v1086
    // Predicated region
    $region50: #{tpu_custom_call.1} parent=1 // pred_check
      _
    $region51: #{tpu_custom_call.1} parent=1 // pred_check_branch
      %1090 = sbr.rel (0) target = $region53
    $region52: #{tpu_custom_call.1} parent=1 // pred_region
      %1092 = vsyncadd [#allocation4], 0
      %s1094 = sshll.u32 [#allocation8], 4
      %s1095 = int_to_ptr.vmem [resolvable:$true] %s1094
      %s1096 = sshll.u32 %s9, 4
      %s1097 = int_to_ptr.hbm [resolvable:$true] %s1096
      %1099 = dma.vmem_to_hbm [thread:$0]  %s1095, 128, %s1097, [#allocation4]
    $region53: #{tpu_custom_call.1} parent=1 // pred_fallthru
      _
    // Predicated region
    $region54: #{tpu_custom_call.1} parent=1 // pred_check
      _
    $region55: #{tpu_custom_call.1} parent=1 // pred_check_branch
      %1101 = sbr.rel (0) target = $region57
    $region56: #{tpu_custom_call.1} parent=1 // pred_region
      %1103 = dma.done [#allocation4], 128
    $region57: #{tpu_custom_call.1} parent=1 // pred_fallthru
      _
    %1104 = vsyncpa [#allocation3], 1
    %1105 = vsyncpa [#allocation6], 1
    %1106 = vsyncpa [#allocation4], 1

</llo_original>
